<compile_context>
chip_gen: v7x
topology: tpu7x:2x2x1
jax: 0.10.0
libtpu: 0.0.40
codegen_flags: <defaults>
</compile_context>

<pallas_src>
import functools

import jax
import jax.numpy as jnp
from jax.experimental import pallas as pl
from jax.experimental.pallas import tpu as pltpu

_LANE = 128
_SUBLANE = 8
_MAX_BLOCK_ROWS = 1024  # batch-tile cap; sized against v7x scoped VMEM, fine on v5e/v6e


def _round_up(n, m):
    return ((n + m - 1) // m) * m


def _afn_kernel(x_ref, p_ref, out_ref, nrm_ref, *,
                input_dim, hidden_dim, output_dim,
                off_b1, off_w2, off_b2, off_w3, off_b3):
    x = x_ref[...]                                                  # (TB, in)

    # ---- layer1: Linear -> ReLU -> Linear -> ReLU (MXU, f32 accumulate) ----
    w1 = p_ref[0:input_dim, 0:hidden_dim]
    b1 = p_ref[off_b1:off_b1 + 1, 0:hidden_dim]
    h1 = jnp.maximum(jnp.dot(x, w1, preferred_element_type=jnp.float32) + b1, 0.0)

    w2 = p_ref[off_w2:off_w2 + hidden_dim, 0:hidden_dim]
    b2 = p_ref[off_b2:off_b2 + 1, 0:hidden_dim]
    h2 = jnp.maximum(jnp.dot(h1, w2, preferred_element_type=jnp.float32) + b2, 0.0)

    # ---- per-row L2 norm (batch mean + div are finalized in the wrapper so
    # the batch grid axis can stay "parallel"). 2-D keepdims reductions stay
    # in native (8,128) vreg layout. ----
    sq = jnp.sum(h2 * h2, axis=1, keepdims=True)                    # (TB, 1)
    nrm_ref[...] = jnp.sqrt(sq)

    # ---- layer2: Linear (W3 stored transposed as (out, hidden)) ----
    w3t = p_ref[off_w3:off_w3 + output_dim, 0:hidden_dim]           # (out, hid)
    b3 = p_ref[off_b3:off_b3 + 1, 0:output_dim]                     # (1, out)
    if output_dim == 1:
        # VPU/XLU path: elementwise mul + lane reduce (skips a latency-only
        # MXU pass; shares the reduce axis with the norm above).
        out = jnp.sum(h2 * w3t, axis=1, keepdims=True) + b3         # (TB, 1)
    else:
        out = jax.lax.dot_general(
            h2, w3t, (((1,), (1,)), ((), ())),
            preferred_element_type=jnp.float32) + b3                # (TB, out)
    out_ref[...] = out.astype(out_ref.dtype)


def pack_params(params):
    """Pack (W1,b1,W2,b2,W3,b3) into ONE zero-padded f32 slab.

    Call ONCE at parameter-creation time (hoisted out of the forward path).
    Each section starts on an 8-row sublane boundary, the width is padded to
    128 lanes (lane-dense HBM rows), W3 is stored transposed (out, hidden).
    Returns (packed, meta) where meta holds the static ints the kernel needs.
    """
    w1, b1, w2, b2, w3, b3 = params
    input_dim, hidden_dim = w1.shape
    output_dim = w3.shape[1]

    width = _round_up(max(hidden_dim, output_dim), _LANE)
    off_b1 = _round_up(input_dim, _SUBLANE)
    off_w2 = off_b1 + _SUBLANE
    off_b2 = off_w2 + _round_up(hidden_dim, _SUBLANE)
    off_w3 = off_b2 + _SUBLANE
    off_b3 = off_w3 + _round_up(output_dim, _SUBLANE)
    rows = _round_up(off_b3 + 1, _SUBLANE)

    packed = jnp.zeros((rows, width), jnp.float32)
    packed = packed.at[0:input_dim, 0:hidden_dim].set(w1)
    packed = packed.at[off_b1, 0:hidden_dim].set(b1.reshape(-1))
    packed = packed.at[off_w2:off_w2 + hidden_dim, 0:hidden_dim].set(w2)
    packed = packed.at[off_b2, 0:hidden_dim].set(b2.reshape(-1))
    packed = packed.at[off_w3:off_w3 + output_dim, 0:hidden_dim].set(w3.T)
    packed = packed.at[off_b3, 0:output_dim].set(b3.reshape(-1))

    meta = dict(input_dim=input_dim, hidden_dim=hidden_dim, output_dim=output_dim,
                off_b1=off_b1, off_w2=off_w2, off_b2=off_b2,
                off_w3=off_w3, off_b3=off_b3)
    return packed, meta


def net_afn_forward(x, packed, *, input_dim, hidden_dim, output_dim,
                    off_b1, off_w2, off_b2, off_w3, off_b3,
                    weight=0.1, radius=25.0, block_rows=None):
    """Forward pass: one pallas_call over a parallel batch grid, then a tiny
    wrapper-side finalize of the batch-mean norm -> div."""
    B = x.shape[0]
    assert x.shape[1] == input_dim

    if block_rows is None:
        block_rows = min(_round_up(B, _SUBLANE), _MAX_BLOCK_ROWS)
    tb = _round_up(block_rows, _SUBLANE)
    num_blocks = -(-B // tb)
    bp = num_blocks * tb
    if bp != B:
        # Zero-pad ragged batches; padded rows are sliced off below (their
        # norms never enter the mean, so no in-kernel mask is needed).
        x = jnp.pad(x, ((0, bp - B), (0, 0)))

    kernel = functools.partial(
        _afn_kernel, input_dim=input_dim, hidden_dim=hidden_dim,
        output_dim=output_dim, off_b1=off_b1, off_w2=off_w2, off_b2=off_b2,
        off_w3=off_w3, off_b3=off_b3)

    p_rows, p_width = packed.shape
    flops = 2 * bp * (input_dim * hidden_dim + hidden_dim * hidden_dim
                      + hidden_dim * output_dim)
    bytes_accessed = 4 * (bp * input_dim + p_rows * p_width
                          + bp * (output_dim + 1))

    out, norms = pl.pallas_call(
        kernel,
        grid=(num_blocks,),
        in_specs=[
            pl.BlockSpec((tb, input_dim), lambda i: (i, 0)),
            # Constant index_map: parameter slab is DMA'd once and stays
            # resident in VMEM across the whole batch grid.
            pl.BlockSpec((p_rows, p_width), lambda i: (0, 0)),
        ],
        out_specs=[
            pl.BlockSpec((tb, output_dim), lambda i: (i, 0)),
            pl.BlockSpec((tb, 1), lambda i: (i, 0)),
        ],
        out_shape=[
            jax.ShapeDtypeStruct((bp, output_dim), jnp.float32),
            jax.ShapeDtypeStruct((bp, 1), jnp.float32),
        ],
        compiler_params=pltpu.CompilerParams(
            dimension_semantics=("parallel",)),
        cost_estimate=pl.CostEstimate(
            flops=flops, transcendentals=bp, bytes_accessed=bytes_accessed),
    )(x, packed)

    # get_L2norm_loss_self_driven finalize (outside the parallel grid).
    mean_norm = jnp.mean(norms[:B, 0])
    div = weight * (mean_norm - radius) ** 2
    return div, out[:B]


def init_params(key, input_dim, hidden_dim, output_dim):
    """Deterministic synthetic init; weights stored as (in, out)."""
    ks = jax.random.split(key, 6)

    def lin(kw, kb, fan_in, fan_out):
        bound = 1.0 / jnp.sqrt(fan_in)
        w = jax.random.uniform(kw, (fan_in, fan_out), jnp.float32, -bound, bound)
        b = jax.random.uniform(kb, (1, fan_out), jnp.float32, -bound, bound)
        return w, b

    w1, b1 = lin(ks[0], ks[1], input_dim, hidden_dim)
    w2, b2 = lin(ks[2], ks[3], hidden_dim, hidden_dim)
    w3, b3 = lin(ks[4], ks[5], hidden_dim, output_dim)
    return (w1, b1, w2, b2, w3, b3)


if __name__ == "__main__":
    input_dim, hidden_dim, output_dim = 16, 32, 1
    batch = 8

    key = jax.random.PRNGKey(0)
    k_x, k_p, k_x2 = jax.random.split(key, 3)
    x = jax.random.normal(k_x, (batch, input_dim), jnp.float32)
    params = init_params(k_p, input_dim, hidden_dim, output_dim)

    # Pack ONCE (hoisted out of the per-call path per the perf review).
    packed, meta = pack_params(params)
    fwd = jax.jit(functools.partial(net_afn_forward, weight=0.1, radius=25.0, **meta))

    div, out = fwd(x, packed)
    jax.block_until_ready((div, out))

    # ---- plain-JAX reference ----
    w1, b1, w2, b2, w3, b3 = params

    def ref(xv):
        h = jnp.maximum(jnp.maximum(xv @ w1 + b1, 0.0) @ w2 + b2, 0.0)
        div_r = 0.1 * (jnp.mean(jnp.linalg.norm(h, axis=1)) - 25.0) ** 2
        return div_r, h @ w3 + b3

    div_ref, out_ref = ref(x)
    assert jnp.allclose(div, div_ref, atol=1e-4, rtol=1e-4)
    assert jnp.allclose(out, out_ref, atol=1e-4, rtol=1e-4)

    # ---- exercise the multi-block parallel grid + ragged-batch padding path ----
    x_big = jax.random.normal(k_x2, (200, input_dim), jnp.float32)
    fwd_big = jax.jit(functools.partial(net_afn_forward, weight=0.1, radius=25.0,
                                        block_rows=128, **meta))
    div2, out2 = fwd_big(x_big, packed)
    jax.block_until_ready((div2, out2))
    div2_ref, out2_ref = ref(x_big)
    assert jnp.allclose(div2, div2_ref, atol=1e-4, rtol=1e-4)
    assert jnp.allclose(out2, out2_ref, atol=1e-4, rtol=1e-4)

    print("KERNEL_OK")
</pallas_src>

<mosaic_0001>
module attributes {stable_mosaic.version = 11 : i64} {
  func.func @_afn_kernel(%arg0: i32, %arg1: memref<8x16xf32, #tpu.memory_space<vmem>>, %arg2: memref<80x128xf32, #tpu.memory_space<vmem>>, %arg3: memref<8x1xf32, #tpu.memory_space<vmem>>, %arg4: memref<8x1xf32, #tpu.memory_space<vmem>>) attributes {dimension_semantics = [#tpu.dimension_semantics<parallel>], iteration_bounds = array<i64: 1>, scalar_prefetch = 0 : i64, scratch_operands = 0 : i64, tpu.core_type = #tpu.core_type<tc>, window_params = [{transform_indices = @transform_0, window_bounds = array<i64: 8, 16>}, {pipeline_mode = #tpu.pipeline_mode<synchronous>, transform_indices = @transform_1, window_bounds = array<i64: 80, 128>}, {transform_indices = @transform_2, window_bounds = array<i64: 8, 1>}, {transform_indices = @transform_3, window_bounds = array<i64: 8, 1>}]} {
    %c0 = arith.constant 0 : index
    %c0_0 = arith.constant 0 : index
    %0 = vector.load %arg1[%c0, %c0_0] : memref<8x16xf32, #tpu.memory_space<vmem>>, vector<8x16xf32>
    %c0_1 = arith.constant 0 : index
    %c0_2 = arith.constant 0 : index
    %1 = vector.load %arg2[%c0_1, %c0_2] : memref<80x128xf32, #tpu.memory_space<vmem>>, vector<16x32xf32>
    %c16 = arith.constant 16 : index
    %c0_3 = arith.constant 0 : index
    %2 = vector.load %arg2[%c16, %c0_3] : memref<80x128xf32, #tpu.memory_space<vmem>>, vector<1x32xf32>
    %cst = arith.constant dense<0.000000e+00> : vector<8x32xf32>
    %3 = tpu.matmul %0, %1, %cst {dimension_numbers = #tpu.dot_dimension_numbers<[1], [0], [0], [1], [0, 0, 1, 1], [], []>} : vector<8x16xf32>, vector<16x32xf32>, vector<8x32xf32> -> vector<8x32xf32>
    %4 = vector.broadcast %2 : vector<1x32xf32> to vector<8x32xf32>
    %5 = arith.addf %3, %4 : vector<8x32xf32>
    %cst_4 = arith.constant 0.000000e+00 : f32
    %6 = vector.broadcast %cst_4 : f32 to vector<8x32xf32>
    %7 = arith.maximumf %5, %6 : vector<8x32xf32>
    %c24 = arith.constant 24 : index
    %c0_5 = arith.constant 0 : index
    %8 = vector.load %arg2[%c24, %c0_5] : memref<80x128xf32, #tpu.memory_space<vmem>>, vector<32x32xf32>
    %c56 = arith.constant 56 : index
    %c0_6 = arith.constant 0 : index
    %9 = vector.load %arg2[%c56, %c0_6] : memref<80x128xf32, #tpu.memory_space<vmem>>, vector<1x32xf32>
    %cst_7 = arith.constant dense<0.000000e+00> : vector<8x32xf32>
    %10 = tpu.matmul %7, %8, %cst_7 {dimension_numbers = #tpu.dot_dimension_numbers<[1], [0], [0], [1], [0, 0, 1, 1], [], []>} : vector<8x32xf32>, vector<32x32xf32>, vector<8x32xf32> -> vector<8x32xf32>
    %11 = vector.broadcast %9 : vector<1x32xf32> to vector<8x32xf32>
    %12 = arith.addf %10, %11 : vector<8x32xf32>
    %cst_8 = arith.constant 0.000000e+00 : f32
    %13 = vector.broadcast %cst_8 : f32 to vector<8x32xf32>
    %14 = arith.maximumf %12, %13 : vector<8x32xf32>
    %15 = arith.mulf %14, %14 : vector<8x32xf32>
    %cst_9 = arith.constant dense<0.000000e+00> : vector<8xf32>
    %16 = vector.multi_reduction <add>, %15, %cst_9 [1] : vector<8x32xf32> to vector<8xf32>
    %17 = vector.shape_cast %16 : vector<8xf32> to vector<8x1xf32>
    %18 = math.sqrt %17 : vector<8x1xf32>
    %c0_10 = arith.constant 0 : index
    %c0_11 = arith.constant 0 : index
    %19 = vector.load %arg4[%c0_10, %c0_11] : memref<8x1xf32, #tpu.memory_space<vmem>>, vector<8x1xf32>
    tpu.vector_store %arg4[%c0_10, %c0_11], %18 {strides = array<i32>} : memref<8x1xf32, #tpu.memory_space<vmem>>, vector<8x1xf32>,
    %c64 = arith.constant 64 : index
    %c0_12 = arith.constant 0 : index
    %20 = vector.load %arg2[%c64, %c0_12] : memref<80x128xf32, #tpu.memory_space<vmem>>, vector<1x32xf32>
    %c72 = arith.constant 72 : index
    %c0_13 = arith.constant 0 : index
    %21 = vector.load %arg2[%c72, %c0_13] : memref<80x128xf32, #tpu.memory_space<vmem>>, vector<1x1xf32>
    %22 = vector.broadcast %20 : vector<1x32xf32> to vector<8x32xf32>
    %23 = arith.mulf %14, %22 : vector<8x32xf32>
    %cst_14 = arith.constant dense<0.000000e+00> : vector<8xf32>
    %24 = vector.multi_reduction <add>, %23, %cst_14 [1] : vector<8x32xf32> to vector<8xf32>
    %25 = vector.shape_cast %24 : vector<8xf32> to vector<8x1xf32>
    %26 = vector.broadcast %21 : vector<1x1xf32> to vector<8x1xf32>
    %27 = arith.addf %25, %26 : vector<8x1xf32>
    %c0_15 = arith.constant 0 : index
    %c0_16 = arith.constant 0 : index
    %28 = vector.load %arg3[%c0_15, %c0_16] : memref<8x1xf32, #tpu.memory_space<vmem>>, vector<8x1xf32>
    tpu.vector_store %arg3[%c0_15, %c0_16], %27 {strides = array<i32>} : memref<8x1xf32, #tpu.memory_space<vmem>>, vector<8x1xf32>,
    return
  }
  func.func @transform_0(%arg0: i32) -> (i32, i32) {
    %c0_i32 = arith.constant 0 : i32
    %c0_i32_0 = arith.constant 0 : i32
    return %arg0, %c0_i32 : i32, i32
  }
  func.func @transform_1(%arg0: i32) -> (i32, i32) {
    %c0_i32 = arith.constant 0 : i32
    %c0_i32_0 = arith.constant 0 : i32
    %c0_i32_1 = arith.constant 0 : i32
    return %c0_i32, %c0_i32_0 : i32, i32
  }
  func.func @transform_2(%arg0: i32) -> (i32, i32) {
    %c0_i32 = arith.constant 0 : i32
    %c0_i32_0 = arith.constant 0 : i32
    return %arg0, %c0_i32 : i32, i32
  }
  func.func @transform_3(%arg0: i32) -> (i32, i32) {
    %c0_i32 = arith.constant 0 : i32
    %c0_i32_0 = arith.constant 0 : i32
    return %arg0, %c0_i32 : i32, i32
  }
}

</mosaic_0001>

<llo_original>
// kernel: net_afn_forward.1
$region0: #{net_afn_forward.1}
  #allocation0 [shape = 'u32[]', space=smem, size = 0x4, offset = 0x4, fixed_abs, tag = 'smem constant byte address 0x4 - core index']
  #allocation1 [shape = 'u32[144,128]{1,0:T(1,128)}', space=vmem, size = 0x12000, scoped, tag = 'internal scratch']
  %s0 = inlined_call_operand.hbm [shape: f32[8,16], index: 0, kind: input, shape index: {}]
  %s1 = inlined_call_operand.hbm [shape: f32[80,128], index: 1, kind: input, shape index: {}]
  %s2 = inlined_call_operand.vmem [shape: f32[8,1], index: 2, kind: output, shape index: {0}]
  %s3 = inlined_call_operand.vmem [shape: f32[8,1], index: 3, kind: output, shape index: {1}]
  %4 = xla_tuple %s2, %s3
  %s5 = sld [smem:[#allocation0]]
  $region34: #{net_afn_forward.1} parent=0
    _
  %s7 = ssub.s32 1, %s5
  %s8 = scalar_select 0, %s7, %s5
  $region1: #{net_afn_forward.1} parent=0
    #allocation2 [shape = 'u8[4096]{0}', space=vmem, size = 0x1000, scoped, tag = 'input window, operand 0, single buffered']
    #allocation3 [shape = 's32[1]{0}', space=sflag, size = 0x4, scoped, tag = 'scoped memory for net_afn_forward.1']
    #allocation4 [shape = 'u8[40960]{0}', space=vmem, size = 0xa000, scoped, tag = 'input window, operand 1, single buffered']
    #allocation5 [shape = 's32[1]{0}', space=sflag, size = 0x4, scoped, tag = 'scoped memory for net_afn_forward.1']
    %9 = vsyncpa [#allocation3], 0
    %10 = vsyncpa [#allocation5], 0
    // Predicated region
    $region2: #{net_afn_forward.1} parent=1 // pred_check
      _
    $region3: #{net_afn_forward.1} parent=1 // pred_check_branch
      %12 = sbr.rel (0) target = $region5
    $region4: #{net_afn_forward.1} parent=1 // pred_region
      %s14 = ssub.s32 128, 128
      %15 = vsyncadd [#allocation3], %s14
      %s17 = sshll.u32 [#allocation2], 4
      %s18 = int_to_ptr.vmem [resolvable:$true] %s17
      %20 = dma.hbm_to_vmem [thread:$0]  %s0, 128, %s18, [#allocation3]
    $region5: #{net_afn_forward.1} parent=1 // pred_fallthru
      _
    // Predicated region
    $region6: #{net_afn_forward.1} parent=1 // pred_check
      _
    $region7: #{net_afn_forward.1} parent=1 // pred_check_branch
      %22 = sbr.rel (0) target = $region9
    $region8: #{net_afn_forward.1} parent=1 // pred_region
      %s24 = ssub.s32 1280, 1280
      %25 = vsyncadd [#allocation5], %s24
      %s26 = sshll.u32 [#allocation4], 4
      %s27 = int_to_ptr.vmem [resolvable:$true] %s26
      %32 = dma.hbm_to_vmem [thread:$0]  %s1, 1280, %s27, [#allocation5], 128, 128, 8
    $region9: #{net_afn_forward.1} parent=1 // pred_fallthru
      _
    // Predicated region
    $region10: #{net_afn_forward.1} parent=1 // pred_check
      _
    $region11: #{net_afn_forward.1} parent=1 // pred_check_branch
      %34 = sbr.rel (0) target = $region13
    $region12: #{net_afn_forward.1} parent=1 // pred_region
      %35 = dma.done [#allocation3], 128
    $region13: #{net_afn_forward.1} parent=1 // pred_fallthru
      _
    // Predicated region
    $region14: #{net_afn_forward.1} parent=1 // pred_check
      _
    $region15: #{net_afn_forward.1} parent=1 // pred_check_branch
      %37 = sbr.rel (0) target = $region17
    $region16: #{net_afn_forward.1} parent=1 // pred_region
      %38 = dma.done [#allocation5], 1280
    $region17: #{net_afn_forward.1} parent=1 // pred_fallthru
      _
    %v39 = vld [vmem:[#allocation2] sm:$0xff]
    %v40 = vld [vmem:[#allocation4] sm:$0xff]
    %v41 = vld [vmem:[#allocation4 + $0x8] sm:$0xff]
    %v42 = vld [vmem:[#allocation4 + $0x10] sm:$0x1]
    %v43 = vlaneseq
    %v44 = vshrl.u32 %v43, 7
    %v45 = vsub.s32 0, %v44
    %v46 = vrot.slane %v42, %v45
    %vm47 = vcmask 130048
    %v49 = vsel %vm47, %v39, 0
    %51 = vmatprep.subr.mxu0 0.0
    %52 = vmatpush1.msra.mxu0 %v40
    %53 = vmatprep.subr.mxu0 0.0
    %54 = vmatpush1.msra.mxu0 %v41
    %55 = vmatprep.subr.mxu0 0.0
    %56 = vmatpush1.msra.mxu0 0.0
    %57 = vmatprep.subr.mxu0 0.0
    %58 = vmatpush1.msra.mxu0 0.0
    %59 = vmatprep.subr.mxu0 0.0
    %60 = vmatpush1.msra.mxu0 0.0
    %61 = vmatprep.subr.mxu0 0.0
    %62 = vmatpush1.msra.mxu0 0.0
    %63 = vmatprep.subr.mxu0 0.0
    %64 = vmatpush1.msra.mxu0 0.0
    %65 = vmatprep.subr.mxu0 0.0
    %66 = vmatpush1.msra.mxu0 0.0
    %67 = vmatprep.subr.mxu0 0.0
    %68 = vmatpush1.msra.mxu0 0.0
    %69 = vmatprep.subr.mxu0 0.0
    %70 = vmatpush1.msra.mxu0 0.0
    %71 = vmatprep.subr.mxu0 0.0
    %72 = vmatpush1.msra.mxu0 0.0
    %73 = vmatprep.subr.mxu0 0.0
    %74 = vmatpush1.msra.mxu0 0.0
    %75 = vmatprep.subr.mxu0 0.0
    %76 = vmatpush1.msra.mxu0 0.0
    %77 = vmatprep.subr.mxu0 0.0
    %78 = vmatpush1.msra.mxu0 0.0
    %79 = vmatprep.subr.mxu0 0.0
    %80 = vmatpush1.msra.mxu0 0.0
    %81 = vmatprep.subr.mxu0 0.0
    %82 = vmatpush1.msra.mxu0 0.0
    %83 = vmatprep.subr.mxu0 0.0
    %84 = vmatpush1.msra.mxu0 0.0
    %85 = vmatprep.subr.mxu0 0.0
    %86 = vmatpush1.msra.mxu0 0.0
    %87 = vmatprep.subr.mxu0 0.0
    %88 = vmatpush1.msra.mxu0 0.0
    %89 = vmatprep.subr.mxu0 0.0
    %90 = vmatpush1.msra.mxu0 0.0
    %91 = vmatprep.subr.mxu0 0.0
    %92 = vmatpush1.msra.mxu0 0.0
    %93 = vmatprep.subr.mxu0 0.0
    %94 = vmatpush1.msra.mxu0 0.0
    %95 = vmatprep.subr.mxu0 0.0
    %96 = vmatpush1.msra.mxu0 0.0
    %97 = vmatprep.subr.mxu0 0.0
    %98 = vmatpush1.msra.mxu0 0.0
    %99 = vmatprep.subr.mxu0 0.0
    %100 = vmatpush1.msra.mxu0 0.0
    %101 = vmatprep.subr.mxu0 0.0
    %102 = vmatpush1.msra.mxu0 0.0
    %103 = vmatprep.subr.mxu0 0.0
    %104 = vmatpush1.msra.mxu0 0.0
    %105 = vmatprep.subr.mxu0 0.0
    %106 = vmatpush1.msra.mxu0 0.0
    %107 = vmatprep.subr.mxu0 0.0
    %108 = vmatpush1.msra.mxu0 0.0
    %109 = vmatprep.subr.mxu0 0.0
    %110 = vmatpush1.msra.mxu0 0.0
    %111 = vmatprep.subr.mxu0 0.0
    %112 = vmatpush1.msra.mxu0 0.0
    %113 = vmatprep.subr.mxu0 0.0
    %114 = vmatpush1.msra.mxu0 0.0
    %115 = vmatprep.mubr.f32.mxu0 0.0
    %116 = vmatmul.mubr.f32.gmra.mrb[0].mxu0 %v49
    %v117 = vpop.f32.mrb[0].mxu0
    %v118 = vadd.f32 %v46, %v117
    %v119 = vpop.f32.mrb[0].mxu0
    %120 = vdwg.mxu0
    %v121 = vmax.f32 %v118, 0.0
    %v122 = vld [vmem:[#allocation4 + $0x18] sm:$0xff]
    %v123 = vld [vmem:[#allocation4 + $0x20] sm:$0xff]
    %v124 = vld [vmem:[#allocation4 + $0x28] sm:$0xff]
    %v125 = vld [vmem:[#allocation4 + $0x30] sm:$0xff]
    %v126 = vld [vmem:[#allocation4 + $0x38] sm:$0x1]
    %v127 = vlaneseq
    %v128 = vshrl.u32 %v127, 7
    %v129 = vsub.s32 0, %v128
    %v130 = vrot.slane %v126, %v129
    %vm131 = vcmask 261120
    %v133 = vsel %vm131, %v121, 0
    %135 = vmatprep.subr.mxu0 0.0
    %136 = vmatpush1.msra.mxu0 %v122
    %137 = vmatprep.subr.mxu0 0.0
    %138 = vmatpush1.msra.mxu0 %v123
    %139 = vmatprep.subr.mxu0 0.0
    %140 = vmatpush1.msra.mxu0 %v124
    %141 = vmatprep.subr.mxu0 0.0
    %142 = vmatpush1.msra.mxu0 %v125
    %143 = vmatprep.subr.mxu0 0.0
    %144 = vmatpush1.msra.mxu0 0.0
    %145 = vmatprep.subr.mxu0 0.0
    %146 = vmatpush1.msra.mxu0 0.0
    %147 = vmatprep.subr.mxu0 0.0
    %148 = vmatpush1.msra.mxu0 0.0
    %149 = vmatprep.subr.mxu0 0.0
    %150 = vmatpush1.msra.mxu0 0.0
    %151 = vmatprep.subr.mxu0 0.0
    %152 = vmatpush1.msra.mxu0 0.0
    %153 = vmatprep.subr.mxu0 0.0
    %154 = vmatpush1.msra.mxu0 0.0
    %155 = vmatprep.subr.mxu0 0.0
    %156 = vmatpush1.msra.mxu0 0.0
    %157 = vmatprep.subr.mxu0 0.0
    %158 = vmatpush1.msra.mxu0 0.0
    %159 = vmatprep.subr.mxu0 0.0
    %160 = vmatpush1.msra.mxu0 0.0
    %161 = vmatprep.subr.mxu0 0.0
    %162 = vmatpush1.msra.mxu0 0.0
    %163 = vmatprep.subr.mxu0 0.0
    %164 = vmatpush1.msra.mxu0 0.0
    %165 = vmatprep.subr.mxu0 0.0
    %166 = vmatpush1.msra.mxu0 0.0
    %167 = vmatprep.subr.mxu0 0.0
    %168 = vmatpush1.msra.mxu0 0.0
    %169 = vmatprep.subr.mxu0 0.0
    %170 = vmatpush1.msra.mxu0 0.0
    %171 = vmatprep.subr.mxu0 0.0
    %172 = vmatpush1.msra.mxu0 0.0
    %173 = vmatprep.subr.mxu0 0.0
    %174 = vmatpush1.msra.mxu0 0.0
    %175 = vmatprep.subr.mxu0 0.0
    %176 = vmatpush1.msra.mxu0 0.0
    %177 = vmatprep.subr.mxu0 0.0
    %178 = vmatpush1.msra.mxu0 0.0
    %179 = vmatprep.subr.mxu0 0.0
    %180 = vmatpush1.msra.mxu0 0.0
    %181 = vmatprep.subr.mxu0 0.0
    %182 = vmatpush1.msra.mxu0 0.0
    %183 = vmatprep.subr.mxu0 0.0
    %184 = vmatpush1.msra.mxu0 0.0
    %185 = vmatprep.subr.mxu0 0.0
    %186 = vmatpush1.msra.mxu0 0.0
    %187 = vmatprep.subr.mxu0 0.0
    %188 = vmatpush1.msra.mxu0 0.0
    %189 = vmatprep.subr.mxu0 0.0
    %190 = vmatpush1.msra.mxu0 0.0
    %191 = vmatprep.subr.mxu0 0.0
    %192 = vmatpush1.msra.mxu0 0.0
    %193 = vmatprep.subr.mxu0 0.0
    %194 = vmatpush1.msra.mxu0 0.0
    %195 = vmatprep.subr.mxu0 0.0
    %196 = vmatpush1.msra.mxu0 0.0
    %197 = vmatprep.subr.mxu0 0.0
    %198 = vmatpush1.msra.mxu0 0.0
    %199 = vmatprep.mubr.f32.mxu0 0.0
    %200 = vmatmul.mubr.f32.gmra.mrb[0].mxu0 %v133
    %v201 = vpop.f32.mrb[0].mxu0
    %v202 = vadd.f32 %v130, %v201
    %v203 = vpop.f32.mrb[0].mxu0
    %204 = vdwg.mxu0
    %v205 = vmax.f32 %v202, 0.0
    %v206 = vmul.f32 %v205, %v205
    %v207 = vsel %vm131, %v206, 0.0
    %208 = vadd.xlane.f32.xlu0 %v207
    %v209 = vpop.xlane.xlu0 %208
    %v210 = vrsqrt.pop %v209
    %v211 = vmul.f32 %v209, %v210
    %vm212 = vcmp.eq.f32.partialorder %v209, inf
    %v213 = vsel %vm212, %v209, %v211
    %vm214 = vcmp.eq.f32.partialorder %v209, 0.0
    %v215 = vand.u32 %v209, 2147483648
    %v216 = vsel %vm214, %v215, %v213
    %vm217 = vcmask 7168
    %218 = vst.msk [vmem:[%s3] sm:$0xff] %vm217, %v216
    %v219 = vld [vmem:[#allocation4 + $0x40] sm:$0x1]
    %v220 = vld [vmem:[#allocation4 + $0x48] sm:$0x1]
    %v221 = vlaneseq
    %v222 = vshrl.u32 %v221, 7
    %v223 = vsub.s32 0, %v222
    %v224 = vrot.slane %v219, %v223
    %v225 = vmul.f32 %v205, %v224
    %v226 = vsel %vm131, %v225, 0.0
    %227 = vadd.xlane.f32.xlu0 %v226
    %v228 = vpop.xlane.xlu0 %227
    %v229 = vlaneseq
    %v230 = vshrl.u32 %v229, 7
    %v231 = vsub.s32 0, %v230
    %v232 = vrot.slane %v220, %v231
    %v233 = vadd.f32 %v228, %v232
    %234 = vst.msk [vmem:[%s2] sm:$0xff] %vm217, %v233
    // Predicated region
    $region18: #{net_afn_forward.1} parent=1 // pred_check
      _
    $region19: #{net_afn_forward.1} parent=1 // pred_check_branch
      %236 = sbr.rel (0) target = $region21
    $region20: #{net_afn_forward.1} parent=1 // pred_region
      _
    $region21: #{net_afn_forward.1} parent=1 // pred_fallthru
      _
    // Predicated region
    $region22: #{net_afn_forward.1} parent=1 // pred_check
      _
    $region23: #{net_afn_forward.1} parent=1 // pred_check_branch
      %238 = sbr.rel (0) target = $region25
    $region24: #{net_afn_forward.1} parent=1 // pred_region
      _
    $region25: #{net_afn_forward.1} parent=1 // pred_fallthru
      _
    // Predicated region
    $region26: #{net_afn_forward.1} parent=1 // pred_check
      _
    $region27: #{net_afn_forward.1} parent=1 // pred_check_branch
      %240 = sbr.rel (0) target = $region29
    $region28: #{net_afn_forward.1} parent=1 // pred_region
      _
    $region29: #{net_afn_forward.1} parent=1 // pred_fallthru
      _
    // Predicated region
    $region30: #{net_afn_forward.1} parent=1 // pred_check
      _
    $region31: #{net_afn_forward.1} parent=1 // pred_check_branch
      %242 = sbr.rel (0) target = $region33
    $region32: #{net_afn_forward.1} parent=1 // pred_region
      _
    $region33: #{net_afn_forward.1} parent=1 // pred_fallthru
      _
    %243 = vsyncpa [#allocation3], 1
    %244 = vsyncpa [#allocation5], 1

</llo_original>
